<compile_context>
chip_gen: v7x
topology: tpu7x:2x2x1
jax: 0.10.0
libtpu: 0.0.40
codegen_flags: <defaults>
</compile_context>

<pallas_src>
import jax
import jax.numpy as jnp
from jax.experimental import pallas as pl
from jax.experimental.pallas import tpu as pltpu


def ffn_kernel(x_ref, w1_ref, b1_ref, w2_ref, b2_ref, g_ref, beta_ref,
               o_ref, acc_ref):
    # x_ref   : (TM, D)   token tile (resident across the hidden-reduction axis)
    # w1_ref  : (D, TH)   fc1 weight slice  ([in, out] layout)
    # b1_ref  : (1, TH)   fc1 bias slice
    # w2_ref  : (TH, D)   fc2 weight slice
    # b2_ref  : (1, D)    fc2 bias
    # g_ref   : (1, D)    LayerNorm gamma
    # beta_ref: (1, D)    LayerNorm beta
    # o_ref   : (TM, D)   output tile
    # acc_ref : (TM, D)   f32 accumulator for fc2 partial sums
    k = pl.program_id(1)

    @pl.when(k == 0)
    def _init():
        acc_ref[...] = jnp.zeros_like(acc_ref)

    # fc1 on this hidden slice: native-dtype operands -> MXU, f32 accumulate.
    h = jnp.dot(x_ref[...], w1_ref[...], preferred_element_type=jnp.float32)
    h = jnp.maximum(h + b1_ref[...], 0.0)

    # fc2 partial sum for this hidden slice, accumulated in f32.
    acc_ref[...] += jnp.dot(h.astype(w2_ref.dtype), w2_ref[...],
                            preferred_element_type=jnp.float32)

    @pl.when(k == pl.num_programs(1) - 1)
    def _finalize():
        x = x_ref[...].astype(jnp.float32)
        # dropout(p=0.0) is identity; residual add.
        y = acc_ref[...] + b2_ref[...] + x

        # LayerNorm over last dim: single-pass stats in f32, eps=1e-5, affine.
        inv_d = 1.0 / y.shape[-1]
        mean = jnp.sum(y, axis=-1, keepdims=True) * inv_d
        mean_sq = jnp.sum(y * y, axis=-1, keepdims=True) * inv_d
        var = jnp.maximum(mean_sq - mean * mean, 0.0)
        y_norm = (y - mean) * jax.lax.rsqrt(var + 1e-5)
        o_ref[...] = (y_norm * g_ref[...] + beta_ref[...]).astype(o_ref.dtype)


def _pick_tile(total, target, align):
    """Largest t <= target with total % t == 0, preferring multiples of `align`."""
    t = min(target, total)
    for cand in range(t, 0, -1):
        if total % cand == 0 and cand % align == 0:
            return cand
    for cand in range(t, 0, -1):
        if total % cand == 0:
            return cand
    return total


def position_wise_feed_forward(x, w1, b1, w2, b2, gamma, beta, *, tm=256, th=512):
    """x: [B, S, D]; w1: [D, H]; b1: [H]; w2: [H, D]; b2, gamma, beta: [D]."""
    B, S, D = x.shape
    H = w1.shape[1]
    T = B * S

    # Row tile: MXU-shaped (target 256 rows), shrunk to divide T for small inputs.
    tm = _pick_tile(T, tm, 8)
    # Hidden tile: bounds fc1/fc2 weight residency; multiple of 128 when possible.
    th = _pick_tile(H, th, 128)
    grid = (T // tm, H // th)

    x2d = x.reshape(T, D)
    b1_2d = b1.reshape(1, H)
    b2_2d = b2.reshape(1, D)
    g_2d = gamma.reshape(1, D)
    be_2d = beta.reshape(1, D)

    itemsize = x.dtype.itemsize
    # Approximate double-buffered VMEM working set + f32 accumulator scratch.
    need = (2 * itemsize * (tm * D + D * th + th + th * D + 3 * D + tm * D)
            + 4 * tm * D)
    vmem_limit = int(min(max(need + (4 << 20), 32 << 20), 64 << 20))

    cost = pl.CostEstimate(
        flops=int(4 * T * D * H + 10 * T * D),
        transcendentals=int(T),
        bytes_accessed=int(itemsize * (x2d.size + w1.size + w2.size + b1.size
                                       + b2.size + gamma.size + beta.size
                                       + T * D)),
    )

    out2d = pl.pallas_call(
        ffn_kernel,
        out_shape=jax.ShapeDtypeStruct((T, D), x.dtype),
        grid_spec=pltpu.PrefetchScalarGridSpec(
            num_scalar_prefetch=0,
            grid=grid,
            in_specs=[
                pl.BlockSpec((tm, D), lambda i, k: (i, 0)),   # x tile
                pl.BlockSpec((D, th), lambda i, k: (0, k)),   # w1 slice
                pl.BlockSpec((1, th), lambda i, k: (0, k)),   # b1 slice
                pl.BlockSpec((th, D), lambda i, k: (k, 0)),   # w2 slice
                pl.BlockSpec((1, D), lambda i, k: (0, 0)),    # b2
                pl.BlockSpec((1, D), lambda i, k: (0, 0)),    # gamma
                pl.BlockSpec((1, D), lambda i, k: (0, 0)),    # beta
            ],
            out_specs=pl.BlockSpec((tm, D), lambda i, k: (i, 0)),
            scratch_shapes=[pltpu.VMEM((tm, D), jnp.float32)],
        ),
        compiler_params=pltpu.CompilerParams(
            dimension_semantics=("parallel", "arbitrary"),
            vmem_limit_bytes=vmem_limit,
        ),
        cost_estimate=cost,
    )(x2d, w1, b1_2d, w2, b2_2d, g_2d, be_2d)

    return out2d.reshape(B, S, D)


def _reference(x, w1, b1, w2, b2, gamma, beta):
    h = jnp.maximum(x @ w1 + b1, 0.0)
    y = h @ w2 + b2 + x
    mean = jnp.mean(y, axis=-1, keepdims=True)
    var = jnp.mean((y - mean) ** 2, axis=-1, keepdims=True)
    return (y - mean) / jnp.sqrt(var + 1e-5) * gamma + beta


if __name__ == "__main__":
    # Small shapes consistent with the module: batch=2, seq=8, dim_model=32, hidden=64.
    # NOTE: for real models make D a multiple of 128 (lane-dense stores/LN reduction);
    # D=32 here uses only 32/128 lanes but is kept to match the toy spec shapes.
    B, S, D, H = 2, 8, 32, 64
    key = jax.random.PRNGKey(0)
    kx, k1, k2, k3, k4 = jax.random.split(key, 5)

    x = jax.random.normal(kx, (B, S, D), dtype=jnp.float32)

    # PyTorch nn.Linear stores weight as [out, in]; we pass the transposed [in, out].
    w1 = jax.random.normal(k1, (D, H), dtype=jnp.float32) * (1.0 / jnp.sqrt(D))
    b1 = jax.random.normal(k2, (H,), dtype=jnp.float32) * 0.02
    w2 = jax.random.normal(k3, (H, D), dtype=jnp.float32) * (1.0 / jnp.sqrt(H))
    b2 = jax.random.normal(k4, (D,), dtype=jnp.float32) * 0.02
    gamma = jnp.ones((D,), dtype=jnp.float32)   # nn.LayerNorm default weight
    beta = jnp.zeros((D,), dtype=jnp.float32)   # nn.LayerNorm default bias

    out = position_wise_feed_forward(x, w1, b1, w2, b2, gamma, beta)
    out = jax.block_until_ready(out)

    ref = _reference(x, w1, b1, w2, b2, gamma, beta)
    assert out.shape == (B, S, D)
    assert jnp.allclose(out, ref, atol=1e-4, rtol=1e-4)

    print("KERNEL_OK")
</pallas_src>

<mosaic_0001>
module attributes {stable_mosaic.version = 11 : i64} {
  func.func @ffn_kernel(%arg0: i32, %arg1: i32, %arg2: memref<16x32xf32, #tpu.memory_space<vmem>>, %arg3: memref<32x64xf32, #tpu.memory_space<vmem>>, %arg4: memref<1x64xf32, #tpu.memory_space<vmem>>, %arg5: memref<64x32xf32, #tpu.memory_space<vmem>>, %arg6: memref<1x32xf32, #tpu.memory_space<vmem>>, %arg7: memref<1x32xf32, #tpu.memory_space<vmem>>, %arg8: memref<1x32xf32, #tpu.memory_space<vmem>>, %arg9: memref<16x32xf32, #tpu.memory_space<vmem>>, %arg10: memref<16x32xf32, #tpu.memory_space<vmem>>) attributes {dimension_semantics = [#tpu.dimension_semantics<parallel>, #tpu.dimension_semantics<arbitrary>], iteration_bounds = array<i64: 1, 1>, scalar_prefetch = 0 : i64, scratch_operands = 1 : i64, tpu.core_type = #tpu.core_type<tc>, window_params = [{transform_indices = @transform_0, window_bounds = array<i64: 16, 32>}, {transform_indices = @transform_1, window_bounds = array<i64: 32, 64>}, {transform_indices = @transform_2, window_bounds = array<i64: 1, 64>}, {transform_indices = @transform_3, window_bounds = array<i64: 64, 32>}, {pipeline_mode = #tpu.pipeline_mode<synchronous>, transform_indices = @transform_4, window_bounds = array<i64: 1, 32>}, {pipeline_mode = #tpu.pipeline_mode<synchronous>, transform_indices = @transform_5, window_bounds = array<i64: 1, 32>}, {pipeline_mode = #tpu.pipeline_mode<synchronous>, transform_indices = @transform_6, window_bounds = array<i64: 1, 32>}, {transform_indices = @transform_7, window_bounds = array<i64: 16, 32>}]} {
    %c0_i32 = arith.constant 0 : i32
    %0 = arith.cmpi eq, %arg1, %c0_i32 : i32
    %1 = arith.extui %0 : i1 to i32
    %c0_i32_0 = arith.constant 0 : i32
    %2 = arith.cmpi ne, %1, %c0_i32_0 : i32
    scf.if %2 {
      %cst_16 = arith.constant 0.000000e+00 : f32
      %19 = vector.broadcast %cst_16 : f32 to vector<16x32xf32>
      %c0_17 = arith.constant 0 : index
      %c0_18 = arith.constant 0 : index
      %20 = vector.load %arg10[%c0_17, %c0_18] : memref<16x32xf32, #tpu.memory_space<vmem>>, vector<16x32xf32>
      tpu.vector_store %arg10[%c0_17, %c0_18], %19 {strides = array<i32>} : memref<16x32xf32, #tpu.memory_space<vmem>>, vector<16x32xf32>,
    } else {
    }
    %c0 = arith.constant 0 : index
    %c0_1 = arith.constant 0 : index
    %3 = vector.load %arg2[%c0, %c0_1] : memref<16x32xf32, #tpu.memory_space<vmem>>, vector<16x32xf32>
    %c0_2 = arith.constant 0 : index
    %c0_3 = arith.constant 0 : index
    %4 = vector.load %arg3[%c0_2, %c0_3] : memref<32x64xf32, #tpu.memory_space<vmem>>, vector<32x64xf32>
    %cst = arith.constant dense<0.000000e+00> : vector<16x64xf32>
    %5 = tpu.matmul %3, %4, %cst {dimension_numbers = #tpu.dot_dimension_numbers<[1], [0], [0], [1], [0, 0, 1, 1], [], []>} : vector<16x32xf32>, vector<32x64xf32>, vector<16x64xf32> -> vector<16x64xf32>
    %c0_4 = arith.constant 0 : index
    %c0_5 = arith.constant 0 : index
    %6 = vector.load %arg4[%c0_4, %c0_5] : memref<1x64xf32, #tpu.memory_space<vmem>>, vector<1x64xf32>
    %7 = vector.broadcast %6 : vector<1x64xf32> to vector<16x64xf32>
    %8 = arith.addf %5, %7 : vector<16x64xf32>
    %cst_6 = arith.constant 0.000000e+00 : f32
    %9 = vector.broadcast %cst_6 : f32 to vector<16x64xf32>
    %10 = arith.maximumf %8, %9 : vector<16x64xf32>
    %c0_7 = arith.constant 0 : index
    %c0_8 = arith.constant 0 : index
    %11 = vector.load %arg10[%c0_7, %c0_8] : memref<16x32xf32, #tpu.memory_space<vmem>>, vector<16x32xf32>
    %c0_9 = arith.constant 0 : index
    %c0_10 = arith.constant 0 : index
    %12 = vector.load %arg5[%c0_9, %c0_10] : memref<64x32xf32, #tpu.memory_space<vmem>>, vector<64x32xf32>
    %cst_11 = arith.constant dense<0.000000e+00> : vector<16x32xf32>
    %13 = tpu.matmul %10, %12, %cst_11 {dimension_numbers = #tpu.dot_dimension_numbers<[1], [0], [0], [1], [0, 0, 1, 1], [], []>} : vector<16x64xf32>, vector<64x32xf32>, vector<16x32xf32> -> vector<16x32xf32>
    %14 = arith.addf %11, %13 : vector<16x32xf32>
    %c0_12 = arith.constant 0 : index
    %c0_13 = arith.constant 0 : index
    %15 = vector.load %arg10[%c0_12, %c0_13] : memref<16x32xf32, #tpu.memory_space<vmem>>, vector<16x32xf32>
    tpu.vector_store %arg10[%c0_12, %c0_13], %14 {strides = array<i32>} : memref<16x32xf32, #tpu.memory_space<vmem>>, vector<16x32xf32>,
    %c0_i32_14 = arith.constant 0 : i32
    %16 = arith.cmpi eq, %arg1, %c0_i32_14 : i32
    %17 = arith.extui %16 : i1 to i32
    %c0_i32_15 = arith.constant 0 : i32
    %18 = arith.cmpi ne, %17, %c0_i32_15 : i32
    scf.if %18 {
      %c0_16 = arith.constant 0 : index
      %c0_17 = arith.constant 0 : index
      %19 = vector.load %arg2[%c0_16, %c0_17] : memref<16x32xf32, #tpu.memory_space<vmem>>, vector<16x32xf32>
      %c0_18 = arith.constant 0 : index
      %c0_19 = arith.constant 0 : index
      %20 = vector.load %arg10[%c0_18, %c0_19] : memref<16x32xf32, #tpu.memory_space<vmem>>, vector<16x32xf32>
      %c0_20 = arith.constant 0 : index
      %c0_21 = arith.constant 0 : index
      %21 = vector.load %arg6[%c0_20, %c0_21] : memref<1x32xf32, #tpu.memory_space<vmem>>, vector<1x32xf32>
      %22 = vector.broadcast %21 : vector<1x32xf32> to vector<16x32xf32>
      %23 = arith.addf %20, %22 : vector<16x32xf32>
      %24 = arith.addf %23, %19 : vector<16x32xf32>
      %cst_22 = arith.constant dense<0.000000e+00> : vector<16xf32>
      %25 = vector.multi_reduction <add>, %24, %cst_22 [1] : vector<16x32xf32> to vector<16xf32>
      %26 = vector.shape_cast %25 : vector<16xf32> to vector<16x1xf32>
      %cst_23 = arith.constant 3.125000e-02 : f32
      %27 = vector.broadcast %cst_23 : f32 to vector<16x1xf32>
      %28 = arith.mulf %26, %27 : vector<16x1xf32>
      %29 = arith.mulf %24, %24 : vector<16x32xf32>
      %cst_24 = arith.constant dense<0.000000e+00> : vector<16xf32>
      %30 = vector.multi_reduction <add>, %29, %cst_24 [1] : vector<16x32xf32> to vector<16xf32>
      %31 = vector.shape_cast %30 : vector<16xf32> to vector<16x1xf32>
      %cst_25 = arith.constant 3.125000e-02 : f32
      %32 = vector.broadcast %cst_25 : f32 to vector<16x1xf32>
      %33 = arith.mulf %31, %32 : vector<16x1xf32>
      %34 = arith.mulf %28, %28 : vector<16x1xf32>
      %35 = arith.subf %33, %34 : vector<16x1xf32>
      %cst_26 = arith.constant 0.000000e+00 : f32
      %36 = vector.broadcast %cst_26 : f32 to vector<16x1xf32>
      %37 = arith.maximumf %35, %36 : vector<16x1xf32>
      %38 = vector.broadcast %28 : vector<16x1xf32> to vector<16x32xf32>
      %39 = arith.subf %24, %38 : vector<16x32xf32>
      %cst_27 = arith.constant 9.99999974E-6 : f32
      %40 = vector.broadcast %cst_27 : f32 to vector<16x1xf32>
      %41 = arith.addf %37, %40 : vector<16x1xf32>
      %42 = math.rsqrt %41 : vector<16x1xf32>
      %43 = vector.broadcast %42 : vector<16x1xf32> to vector<16x32xf32>
      %44 = arith.mulf %39, %43 : vector<16x32xf32>
      %c0_28 = arith.constant 0 : index
      %c0_29 = arith.constant 0 : index
      %45 = vector.load %arg7[%c0_28, %c0_29] : memref<1x32xf32, #tpu.memory_space<vmem>>, vector<1x32xf32>
      %46 = vector.broadcast %45 : vector<1x32xf32> to vector<16x32xf32>
      %47 = arith.mulf %44, %46 : vector<16x32xf32>
      %c0_30 = arith.constant 0 : index
      %c0_31 = arith.constant 0 : index
      %48 = vector.load %arg8[%c0_30, %c0_31] : memref<1x32xf32, #tpu.memory_space<vmem>>, vector<1x32xf32>
      %49 = vector.broadcast %48 : vector<1x32xf32> to vector<16x32xf32>
      %50 = arith.addf %47, %49 : vector<16x32xf32>
      %c0_32 = arith.constant 0 : index
      %c0_33 = arith.constant 0 : index
      %51 = vector.load %arg9[%c0_32, %c0_33] : memref<16x32xf32, #tpu.memory_space<vmem>>, vector<16x32xf32>
      tpu.vector_store %arg9[%c0_32, %c0_33], %50 {strides = array<i32>} : memref<16x32xf32, #tpu.memory_space<vmem>>, vector<16x32xf32>,
    } else {
    }
    return
  }
  func.func @transform_0(%arg0: i32, %arg1: i32) -> (i32, i32) {
    %c0_i32 = arith.constant 0 : i32
    %c0_i32_0 = arith.constant 0 : i32
    return %arg0, %c0_i32 : i32, i32
  }
  func.func @transform_1(%arg0: i32, %arg1: i32) -> (i32, i32) {
    %c0_i32 = arith.constant 0 : i32
    %c0_i32_0 = arith.constant 0 : i32
    return %c0_i32, %arg1 : i32, i32
  }
  func.func @transform_2(%arg0: i32, %arg1: i32) -> (i32, i32) {
    %c0_i32 = arith.constant 0 : i32
    %c0_i32_0 = arith.constant 0 : i32
    return %c0_i32, %arg1 : i32, i32
  }
  func.func @transform_3(%arg0: i32, %arg1: i32) -> (i32, i32) {
    %c0_i32 = arith.constant 0 : i32
    %c0_i32_0 = arith.constant 0 : i32
    return %arg1, %c0_i32 : i32, i32
  }
  func.func @transform_4(%arg0: i32, %arg1: i32) -> (i32, i32) {
    %c0_i32 = arith.constant 0 : i32
    %c0_i32_0 = arith.constant 0 : i32
    %c0_i32_1 = arith.constant 0 : i32
    return %c0_i32, %c0_i32_0 : i32, i32
  }
  func.func @transform_5(%arg0: i32, %arg1: i32) -> (i32, i32) {
    %c0_i32 = arith.constant 0 : i32
    %c0_i32_0 = arith.constant 0 : i32
    %c0_i32_1 = arith.constant 0 : i32
    return %c0_i32, %c0_i32_0 : i32, i32
  }
  func.func @transform_6(%arg0: i32, %arg1: i32) -> (i32, i32) {
    %c0_i32 = arith.constant 0 : i32
    %c0_i32_0 = arith.constant 0 : i32
    %c0_i32_1 = arith.constant 0 : i32
    return %c0_i32, %c0_i32_0 : i32, i32
  }
  func.func @transform_7(%arg0: i32, %arg1: i32) -> (i32, i32) {
    %c0_i32 = arith.constant 0 : i32
    %c0_i32_0 = arith.constant 0 : i32
    return %arg0, %c0_i32 : i32, i32
  }
}

</mosaic_0001>

<llo_original>
// kernel: tpu_custom_call.1
$region0: #{tpu_custom_call.1}
  #allocation0 [shape = 'u32[]', space=smem, size = 0x4, offset = 0x4, fixed_abs, tag = 'smem constant byte address 0x4 - core index']
  #allocation1 [shape = 'u32[144,128]{1,0:T(1,128)}', space=vmem, size = 0x12000, scoped, tag = 'internal scratch']
  #allocation2 [shape = 'f32[16,32]{1,0:T(8,128)}', space=vmem, size = 0x2000, scoped, tag = 'scratch operand']
  %s0 = inlined_call_operand.vmem [shape: f32[16,32], index: 0, kind: input, shape index: {}]
  %s1 = inlined_call_operand.vmem [shape: f32[32,64], index: 1, kind: input, shape index: {}]
  %s2 = inlined_call_operand.vmem [shape: f32[1,64], index: 2, kind: input, shape index: {}]
  %s3 = inlined_call_operand.vmem [shape: f32[64,32], index: 3, kind: input, shape index: {}]
  %s4 = inlined_call_operand.vmem [shape: f32[1,32], index: 4, kind: input, shape index: {}]
  %s5 = inlined_call_operand.vmem [shape: f32[1,32], index: 5, kind: input, shape index: {}]
  %s6 = inlined_call_operand.vmem [shape: f32[1,32], index: 6, kind: input, shape index: {}]
  %s7 = inlined_call_operand.hbm [shape: f32[16,32], index: 7, kind: output, shape index: {}]
  %s8 = sld [smem:[#allocation0]]
  $region46: #{tpu_custom_call.1} parent=0
    _
  %s10 = ssub.s32 1, %s8
  %s11 = scalar_select 0, %s10, %s8
  $region1: #{tpu_custom_call.1} parent=0
    #allocation3 [shape = 'u8[8192]{0}', space=vmem, size = 0x2000, scoped, tag = 'output window, operand 0, single buffered']
    #allocation4 [shape = 's32[1]{0}', space=sflag, size = 0x4, scoped, tag = 'scoped memory for tpu_custom_call.1']
    %12 = vsyncpa [#allocation4], 0
    // Predicated region
    $region2: #{tpu_custom_call.1} parent=1 // pred_check
      _
    $region3: #{tpu_custom_call.1} parent=1 // pred_check_branch
      %14 = sbr.rel (0) target = $region5
    $region4: #{tpu_custom_call.1} parent=1 // pred_region
      _
    $region5: #{tpu_custom_call.1} parent=1 // pred_fallthru
      _
    // Predicated region
    $region6: #{tpu_custom_call.1} parent=1 // pred_check
      _
    $region7: #{tpu_custom_call.1} parent=1 // pred_check_branch
      %16 = sbr.rel (0) target = $region9
    $region8: #{tpu_custom_call.1} parent=1 // pred_region
      _
    $region9: #{tpu_custom_call.1} parent=1 // pred_fallthru
      _
    // Predicated region
    $region10: #{tpu_custom_call.1} parent=1 // pred_check
      _
    $region11: #{tpu_custom_call.1} parent=1 // pred_check_branch
      %18 = sbr.rel (0) target = $region13
    $region12: #{tpu_custom_call.1} parent=1 // pred_region
      _
    $region13: #{tpu_custom_call.1} parent=1 // pred_fallthru
      _
    // Predicated region
    $region14: #{tpu_custom_call.1} parent=1 // pred_check
      _
    $region15: #{tpu_custom_call.1} parent=1 // pred_check_branch
      %20 = sbr.rel (0) target = $region17
    $region16: #{tpu_custom_call.1} parent=1 // pred_region
      _
    $region17: #{tpu_custom_call.1} parent=1 // pred_fallthru
      _
    // Predicated region
    $region18: #{tpu_custom_call.1} parent=1 // pred_check
      _
    $region19: #{tpu_custom_call.1} parent=1 // pred_check_branch
      %22 = sbr.rel (0) target = $region21
    $region20: #{tpu_custom_call.1} parent=1 // pred_region
      _
    $region21: #{tpu_custom_call.1} parent=1 // pred_fallthru
      _
    // Predicated region
    $region22: #{tpu_custom_call.1} parent=1 // pred_check
      _
    $region23: #{tpu_custom_call.1} parent=1 // pred_check_branch
      %24 = sbr.rel (0) target = $region25
    $region24: #{tpu_custom_call.1} parent=1 // pred_region
      _
    $region25: #{tpu_custom_call.1} parent=1 // pred_fallthru
      _
    // Predicated region
    $region26: #{tpu_custom_call.1} parent=1 // pred_check
      _
    $region27: #{tpu_custom_call.1} parent=1 // pred_check_branch
      %26 = sbr.rel (0) target = $region29
    $region28: #{tpu_custom_call.1} parent=1 // pred_region
      _
    $region29: #{tpu_custom_call.1} parent=1 // pred_fallthru
      _
    %p27 = scmp.eq.s32.totalorder 0, 0
    // Predicated region
    $region30: #{tpu_custom_call.1} parent=1 // pred_check
      %p28 = pneg %p27
    $region31: #{tpu_custom_call.1} parent=1 // pred_check_branch
      %30 = sbr.rel (%p28) target = $region33
    $region32: #{tpu_custom_call.1} parent=1 // pred_region
      %vm31 = vcmask 261120
      %32 = vst.msk [vmem:[#allocation2] sm:$0xff] %vm31, 0.0
      %33 = vst.msk [vmem:[#allocation2 + $0x8] sm:$0xff] %vm31, 0.0
    $region33: #{tpu_custom_call.1} parent=1 // pred_fallthru
      _
    %v34 = vld [vmem:[%s0] sm:$0xff]
    %v35 = vld [vmem:[%s0 + $0x8] sm:$0xff]
    %v36 = vld [vmem:[%s1] sm:$0xff]
    %v37 = vld [vmem:[%s1 + $0x8] sm:$0xff]
    %v38 = vld [vmem:[%s1 + $0x10] sm:$0xff]
    %v39 = vld [vmem:[%s1 + $0x18] sm:$0xff]
    %v40 = vld [vmem:[%s2] sm:$0x1]
    %v42 = vlaneseq
    %v43 = vshrl.u32 %v42, 7
    %v44 = vsub.s32 0, %v43
    %v45 = vrot.slane %v40, %v44
    %vm47 = vcmask 261120
    %v49 = vsel %vm47, %v34, 0
    %v52 = vsel %vm47, %v35, 0
    %54 = vmatprep.subr.mxu0 0.0
    %55 = vmatpush1.msra.mxu0 %v36
    %56 = vmatprep.subr.mxu0 0.0
    %57 = vmatpush1.msra.mxu0 %v37
    %58 = vmatprep.subr.mxu0 0.0
    %59 = vmatpush1.msra.mxu0 %v38
    %60 = vmatprep.subr.mxu0 0.0
    %61 = vmatpush1.msra.mxu0 %v39
    %62 = vmatprep.subr.mxu0 0.0
    %63 = vmatpush1.msra.mxu0 0.0
    %64 = vmatprep.subr.mxu0 0.0
    %65 = vmatpush1.msra.mxu0 0.0
    %66 = vmatprep.subr.mxu0 0.0
    %67 = vmatpush1.msra.mxu0 0.0
    %68 = vmatprep.subr.mxu0 0.0
    %69 = vmatpush1.msra.mxu0 0.0
    %70 = vmatprep.subr.mxu0 0.0
    %71 = vmatpush1.msra.mxu0 0.0
    %72 = vmatprep.subr.mxu0 0.0
    %73 = vmatpush1.msra.mxu0 0.0
    %74 = vmatprep.subr.mxu0 0.0
    %75 = vmatpush1.msra.mxu0 0.0
    %76 = vmatprep.subr.mxu0 0.0
    %77 = vmatpush1.msra.mxu0 0.0
    %78 = vmatprep.subr.mxu0 0.0
    %79 = vmatpush1.msra.mxu0 0.0
    %80 = vmatprep.subr.mxu0 0.0
    %81 = vmatpush1.msra.mxu0 0.0
    %82 = vmatprep.subr.mxu0 0.0
    %83 = vmatpush1.msra.mxu0 0.0
    %84 = vmatprep.subr.mxu0 0.0
    %85 = vmatpush1.msra.mxu0 0.0
    %86 = vmatprep.subr.mxu0 0.0
    %87 = vmatpush1.msra.mxu0 0.0
    %88 = vmatprep.subr.mxu0 0.0
    %89 = vmatpush1.msra.mxu0 0.0
    %90 = vmatprep.subr.mxu0 0.0
    %91 = vmatpush1.msra.mxu0 0.0
    %92 = vmatprep.subr.mxu0 0.0
    %93 = vmatpush1.msra.mxu0 0.0
    %94 = vmatprep.subr.mxu0 0.0
    %95 = vmatpush1.msra.mxu0 0.0
    %96 = vmatprep.subr.mxu0 0.0
    %97 = vmatpush1.msra.mxu0 0.0
    %98 = vmatprep.subr.mxu0 0.0
    %99 = vmatpush1.msra.mxu0 0.0
    %100 = vmatprep.subr.mxu0 0.0
    %101 = vmatpush1.msra.mxu0 0.0
    %102 = vmatprep.subr.mxu0 0.0
    %103 = vmatpush1.msra.mxu0 0.0
    %104 = vmatprep.subr.mxu0 0.0
    %105 = vmatpush1.msra.mxu0 0.0
    %106 = vmatprep.subr.mxu0 0.0
    %107 = vmatpush1.msra.mxu0 0.0
    %108 = vmatprep.subr.mxu0 0.0
    %109 = vmatpush1.msra.mxu0 0.0
    %110 = vmatprep.subr.mxu0 0.0
    %111 = vmatpush1.msra.mxu0 0.0
    %112 = vmatprep.subr.mxu0 0.0
    %113 = vmatpush1.msra.mxu0 0.0
    %114 = vmatprep.subr.mxu0 0.0
    %115 = vmatpush1.msra.mxu0 0.0
    %116 = vmatprep.subr.mxu0 0.0
    %117 = vmatpush1.msra.mxu0 0.0
    %118 = vmatprep.mubr.f32.mxu0 0.0
    %119 = vmatmul.mubr.f32.gmra.mrb[0].mxu0 %v49
    %v120 = vpop.f32.mrb[0].mxu0
    %v121 = vadd.f32 %v45, %v120
    %v122 = vpop.f32.mrb[0].mxu0
    %123 = vmatprep.mubr.f32.mxu0 0.0
    %124 = vmatmul.mubr.f32.gmra.mrb[0].mxu0 %v52
    %v125 = vpop.f32.mrb[0].mxu0
    %v126 = vadd.f32 %v45, %v125
    %v127 = vpop.f32.mrb[0].mxu0
    %128 = vdwg.mxu0
    %v129 = vmax.f32 %v121, 0.0
    %v130 = vmax.f32 %v126, 0.0
    %v131 = vld [vmem:[#allocation2] sm:$0xff]
    %v132 = vld [vmem:[#allocation2 + $0x8] sm:$0xff]
    %v133 = vld [vmem:[%s3] sm:$0xff]
    %v134 = vld [vmem:[%s3 + $0x8] sm:$0xff]
    %v135 = vld [vmem:[%s3 + $0x10] sm:$0xff]
    %v136 = vld [vmem:[%s3 + $0x18] sm:$0xff]
    %v137 = vld [vmem:[%s3 + $0x20] sm:$0xff]
    %v138 = vld [vmem:[%s3 + $0x28] sm:$0xff]
    %v139 = vld [vmem:[%s3 + $0x30] sm:$0xff]
    %v140 = vld [vmem:[%s3 + $0x38] sm:$0xff]
    %vm141 = vcmask 523264
    %v143 = vsel %vm141, %v129, 0
    %v146 = vsel %vm141, %v130, 0
    %148 = vmatprep.subr.mxu0 0.0
    %149 = vmatpush1.msra.mxu0 %v133
    %150 = vmatprep.subr.mxu0 0.0
    %151 = vmatpush1.msra.mxu0 %v134
    %152 = vmatprep.subr.mxu0 0.0
    %153 = vmatpush1.msra.mxu0 %v135
    %154 = vmatprep.subr.mxu0 0.0
    %155 = vmatpush1.msra.mxu0 %v136
    %156 = vmatprep.subr.mxu0 0.0
    %157 = vmatpush1.msra.mxu0 %v137
    %158 = vmatprep.subr.mxu0 0.0
    %159 = vmatpush1.msra.mxu0 %v138
    %160 = vmatprep.subr.mxu0 0.0
    %161 = vmatpush1.msra.mxu0 %v139
    %162 = vmatprep.subr.mxu0 0.0
    %163 = vmatpush1.msra.mxu0 %v140
    %164 = vmatprep.subr.mxu0 0.0
    %165 = vmatpush1.msra.mxu0 0.0
    %166 = vmatprep.subr.mxu0 0.0
    %167 = vmatpush1.msra.mxu0 0.0
    %168 = vmatprep.subr.mxu0 0.0
    %169 = vmatpush1.msra.mxu0 0.0
    %170 = vmatprep.subr.mxu0 0.0
    %171 = vmatpush1.msra.mxu0 0.0
    %172 = vmatprep.subr.mxu0 0.0
    %173 = vmatpush1.msra.mxu0 0.0
    %174 = vmatprep.subr.mxu0 0.0
    %175 = vmatpush1.msra.mxu0 0.0
    %176 = vmatprep.subr.mxu0 0.0
    %177 = vmatpush1.msra.mxu0 0.0
    %178 = vmatprep.subr.mxu0 0.0
    %179 = vmatpush1.msra.mxu0 0.0
    %180 = vmatprep.subr.mxu0 0.0
    %181 = vmatpush1.msra.mxu0 0.0
    %182 = vmatprep.subr.mxu0 0.0
    %183 = vmatpush1.msra.mxu0 0.0
    %184 = vmatprep.subr.mxu0 0.0
    %185 = vmatpush1.msra.mxu0 0.0
    %186 = vmatprep.subr.mxu0 0.0
    %187 = vmatpush1.msra.mxu0 0.0
    %188 = vmatprep.subr.mxu0 0.0
    %189 = vmatpush1.msra.mxu0 0.0
    %190 = vmatprep.subr.mxu0 0.0
    %191 = vmatpush1.msra.mxu0 0.0
    %192 = vmatprep.subr.mxu0 0.0
    %193 = vmatpush1.msra.mxu0 0.0
    %194 = vmatprep.subr.mxu0 0.0
    %195 = vmatpush1.msra.mxu0 0.0
    %196 = vmatprep.subr.mxu0 0.0
    %197 = vmatpush1.msra.mxu0 0.0
    %198 = vmatprep.subr.mxu0 0.0
    %199 = vmatpush1.msra.mxu0 0.0
    %200 = vmatprep.subr.mxu0 0.0
    %201 = vmatpush1.msra.mxu0 0.0
    %202 = vmatprep.subr.mxu0 0.0
    %203 = vmatpush1.msra.mxu0 0.0
    %204 = vmatprep.subr.mxu0 0.0
    %205 = vmatpush1.msra.mxu0 0.0
    %206 = vmatprep.subr.mxu0 0.0
    %207 = vmatpush1.msra.mxu0 0.0
    %208 = vmatprep.subr.mxu0 0.0
    %209 = vmatpush1.msra.mxu0 0.0
    %210 = vmatprep.subr.mxu0 0.0
    %211 = vmatpush1.msra.mxu0 0.0
    %212 = vmatprep.mubr.f32.mxu0 0.0
    %213 = vmatmul.mubr.f32.gmra.mrb[0].mxu0 %v143
    %v214 = vpop.f32.mrb[0].mxu0
    %v215 = vadd.f32 0.0, %v214
    %v216 = vpop.f32.mrb[0].mxu0
    %217 = vmatprep.mubr.f32.mxu0 0.0
    %218 = vmatmul.mubr.f32.gmra.mrb[0].mxu0 %v146
    %v219 = vpop.f32.mrb[0].mxu0
    %v220 = vadd.f32 0.0, %v219
    %v221 = vpop.f32.mrb[0].mxu0
    %222 = vdwg.mxu0
    %v223 = vadd.f32 %v131, %v215
    %v224 = vadd.f32 %v132, %v220
    %225 = vst.msk [vmem:[#allocation2] sm:$0xff] %vm47, %v223
    %226 = vst.msk [vmem:[#allocation2 + $0x8] sm:$0xff] %vm47, %v224
    // Predicated region
    $region34: #{tpu_custom_call.1} parent=1 // pred_check
      %p227 = pneg %p27
    $region35: #{tpu_custom_call.1} parent=1 // pred_check_branch
      %229 = sbr.rel (%p227) target = $region37
    $region36: #{tpu_custom_call.1} parent=1 // pred_region
      %v230 = vld [vmem:[%s0] sm:$0xff]
      %v231 = vld [vmem:[%s0 + $0x8] sm:$0xff]
      %v232 = vld [vmem:[#allocation2] sm:$0xff]
      %v233 = vld [vmem:[#allocation2 + $0x8] sm:$0xff]
      %v234 = vld [vmem:[%s4] sm:$0x1]
      %v236 = vlaneseq
      %v237 = vshrl.u32 %v236, 7
      %v238 = vsub.s32 0, %v237
      %v239 = vrot.slane %v234, %v238
      %v241 = vadd.f32 %v232, %v239
      %v242 = vadd.f32 %v233, %v239
      %v243 = vadd.f32 %v241, %v230
      %v244 = vadd.f32 %v242, %v231
      %v245 = vsel %vm47, %v243, 0.0
      %246 = vadd.xlane.f32.xlu0 %v245
      %v247 = vpop.xlane.xlu0 %246
      %v248 = vsel %vm47, %v244, 0.0
      %249 = vadd.xlane.f32.xlu0 %v248
      %v250 = vpop.xlane.xlu0 %249
      %v251 = vmul.f32 %v247, 0.03125
      %v252 = vmul.f32 %v250, 0.03125
      %v253 = vmul.f32 %v243, %v243
      %v254 = vmul.f32 %v244, %v244
      %v255 = vsel %vm47, %v253, 0.0
      %256 = vadd.xlane.f32.xlu0 %v255
      %v257 = vpop.xlane.xlu0 %256
      %v258 = vsel %vm47, %v254, 0.0
      %259 = vadd.xlane.f32.xlu0 %v258
      %v260 = vpop.xlane.xlu0 %259
      %v261 = vmul.f32 %v257, 0.03125
      %v262 = vmul.f32 %v260, 0.03125
      %v263 = vmul.f32 %v251, %v251
      %v264 = vmul.f32 %v252, %v252
      %v265 = vsub.f32 %v261, %v263
      %v266 = vsub.f32 %v262, %v264
      %v267 = vmax.f32 %v265, 0.0
      %v268 = vmax.f32 %v266, 0.0
      %v269 = vsub.f32 %v243, %v251
      %v270 = vsub.f32 %v244, %v252
      %v271 = vadd.f32 %v267, 1e-05
      %v272 = vadd.f32 %v268, 1e-05
      %v273 = vrsqrt.pop %v271
      %v274 = vrsqrt.pop %v272
      %v275 = vmul.f32 %v269, %v273
      %v276 = vmul.f32 %v270, %v274
      %v277 = vld [vmem:[%s5] sm:$0x1]
      %v279 = vlaneseq
      %v280 = vshrl.u32 %v279, 7
      %v281 = vsub.s32 0, %v280
      %v282 = vrot.slane %v277, %v281
      %v284 = vmul.f32 %v275, %v282
      %v285 = vmul.f32 %v276, %v282
      %v286 = vld [vmem:[%s6] sm:$0x1]
      %v288 = vlaneseq
      %v289 = vshrl.u32 %v288, 7
      %v290 = vsub.s32 0, %v289
      %v291 = vrot.slane %v286, %v290
      %v293 = vadd.f32 %v284, %v291
      %v294 = vadd.f32 %v285, %v291
      %295 = vst.msk [vmem:[#allocation3] sm:$0xff] %vm47, %v293
      %296 = vst.msk [vmem:[#allocation3 + $0x8] sm:$0xff] %vm47, %v294
    $region37: #{tpu_custom_call.1} parent=1 // pred_fallthru
      _
    // Predicated region
    $region38: #{tpu_custom_call.1} parent=1 // pred_check
      _
    $region39: #{tpu_custom_call.1} parent=1 // pred_check_branch
      %298 = sbr.rel (0) target = $region41
    $region40: #{tpu_custom_call.1} parent=1 // pred_region
      %s300 = ssub.s32 256, 256
      %301 = vsyncadd [#allocation4], %s300
      %s302 = sshll.u32 [#allocation3], 4
      %s303 = int_to_ptr.vmem [resolvable:$true] %s302
      %308 = dma.vmem_to_hbm [thread:$0]  %s303, 256, %s7, [#allocation4], 128, 128, 8
    $region41: #{tpu_custom_call.1} parent=1 // pred_fallthru
      _
    // Predicated region
    $region42: #{tpu_custom_call.1} parent=1 // pred_check
      _
    $region43: #{tpu_custom_call.1} parent=1 // pred_check_branch
      %310 = sbr.rel (0) target = $region45
    $region44: #{tpu_custom_call.1} parent=1 // pred_region
      %311 = dma.done [#allocation4], 256
    $region45: #{tpu_custom_call.1} parent=1 // pred_fallthru
      _
    %312 = vsyncpa [#allocation4], 1

</llo_original>
